<compile_context>
chip_gen: v7x
topology: tpu7x:2x2x1
jax: 0.10.0
libtpu: 0.0.40
codegen_flags: <defaults>
</compile_context>

<pallas_src>
import jax
import jax.numpy as jnp
from jax.experimental import pallas as pl
from jax.experimental.pallas import tpu as pltpu

# ---- model dimensions (small, consistent with SadTalker's Audio2Coeff) ----
T = 8                    # frames per item
MEL_BINS = 16
MEL_STEPS = 16
MEL_FLAT = MEL_BINS * MEL_STEPS   # 256
H = 256                  # audio embedding dim
EXP_DIM = 64             # expression coefficients
POSE_DIM = 6             # pose coefficients
N_STYLES = 46            # pose-style classes
HP = 128                 # pose decoder hidden
OUT_DIM = EXP_DIM + POSE_DIM      # 70

OUT_PAD = 128            # lane-dense padded output width (exp 0:64, pose 64:70)
FUSED = OUT_PAD + HP     # 256: fused slab = [exp | pad | pose-hidden]
TR_MAX = 512             # max rows per grid step (adaptive, multiple of 128)


# --------------------------------------------------------------------------
# Fused kernel: one row-tile of the whole batch per grid step.
# --------------------------------------------------------------------------
def _audio2coeff_fused_kernel(
    mel_ref, bias_ref,                     # streamed per-row activations
    we1_ref, be1_ref, wa_ref, wp2_ref,     # resident weights (constant index)
    out_ref,
):
    f32 = jnp.float32
    bf16 = jnp.bfloat16

    # audio encoder (ExpNet front-end): relu(mel @ We1 + be1)   -> [TR, H]
    emb = jnp.maximum(
        jnp.dot(mel_ref[...], we1_ref[...], preferred_element_type=f32)
        + be1_ref[...],
        0.0,
    )

    # fused slab [TR, 256]:
    #   lanes   0:64  = emb@we2a + (rexp@we2b + ratio*we2c + be2)   (exp pre-out)
    #   lanes  64:70  = bp2                                          (from bias)
    #   lanes 128:256 = emb@wp1a + (ref_pose@wp1b + wp1c[style] + bp1)
    fused = (
        jnp.dot(emb.astype(bf16), wa_ref[...], preferred_element_type=f32)
        + bias_ref[...]
    )

    pose_h = jnp.maximum(fused[:, OUT_PAD:], 0.0)             # [TR, HP], aligned

    # output slab [TR, 128]: exp in 0:64, pose in 64:70 (wp2 padded to land
    # in lanes 64:70; bp2 already present via the bias slab).
    out = fused[:, :OUT_PAD] + jnp.dot(
        pose_h.astype(bf16), wp2_ref[...], preferred_element_type=f32)
    out_ref[...] = out.astype(out_ref.dtype)


# --------------------------------------------------------------------------
# Parameters
# --------------------------------------------------------------------------
def _make_params(key):
    """Deterministic synthetic Audio2Coeff parameters (f32 'checkpoint')."""
    ks = jax.random.split(key, 12)
    s = 0.02
    return {
        "we1":  jax.random.normal(ks[0], (MEL_FLAT, H), jnp.float32) * s,
        "be1":  jnp.zeros((1, H), jnp.float32),
        "we2a": jax.random.normal(ks[1], (H, EXP_DIM), jnp.float32) * s,
        "we2b": jax.random.normal(ks[2], (EXP_DIM, EXP_DIM), jnp.float32) * s,
        "we2c": jax.random.normal(ks[3], (1, EXP_DIM), jnp.float32) * s,
        "be2":  jnp.zeros((1, EXP_DIM), jnp.float32),
        "wp1a": jax.random.normal(ks[4], (H, HP), jnp.float32) * s,
        "wp1b": jax.random.normal(ks[5], (POSE_DIM, HP), jnp.float32) * s,
        "wp1c": jax.random.normal(ks[6], (N_STYLES, HP), jnp.float32) * s,
        "bp1":  jnp.zeros((1, HP), jnp.float32),
        "wp2":  jax.random.normal(ks[7], (HP, POSE_DIM), jnp.float32) * s,
        "bp2":  jnp.zeros((1, POSE_DIM), jnp.float32),
    }


def _build_fused_params(p):
    """Fuse / pad weights once at init; MXU weights stored as bf16."""
    # fused [H, 256] weight: exp head in lanes 0:64, pose hidden in 128:256
    wa = jnp.zeros((H, FUSED), jnp.float32)
    wa = wa.at[:, :EXP_DIM].set(p["we2a"])
    wa = wa.at[:, OUT_PAD:].set(p["wp1a"])
    # pose decoder padded so its result lands in output lanes 64:70
    wp2 = jnp.zeros((HP, OUT_PAD), jnp.float32).at[
        :, EXP_DIM:EXP_DIM + POSE_DIM].set(p["wp2"])
    # wrapper-side bias weights, pre-padded to OUT_PAD lanes (init-time work)
    we2b_p = jnp.zeros((EXP_DIM, OUT_PAD), jnp.float32).at[:, :EXP_DIM].set(p["we2b"])
    we2c_p = jnp.zeros((1, OUT_PAD), jnp.float32).at[:, :EXP_DIM].set(p["we2c"])
    cbias_p = jnp.zeros((1, OUT_PAD), jnp.float32)
    cbias_p = cbias_p.at[:, :EXP_DIM].set(p["be2"])
    cbias_p = cbias_p.at[:, EXP_DIM:EXP_DIM + POSE_DIM].set(p["bp2"])
    return {
        "we1_bf": p["we1"].astype(jnp.bfloat16),
        "be1":    p["be1"],
        "wa_bf":  wa.astype(jnp.bfloat16),
        "wp2_bf": wp2.astype(jnp.bfloat16),
        # f32 weights for the hoisted per-row bias computation in the wrapper
        "we2b_p": we2b_p, "we2c_p": we2c_p, "cbias_p": cbias_p,
        "wp1b": p["wp1b"], "wp1c": p["wp1c"], "bp1": p["bp1"],
    }


# --------------------------------------------------------------------------
# Batched driver: one pallas_call for the whole batch.
# --------------------------------------------------------------------------
@jax.jit
def _run_batch(mel_rows, rexp_rows, ratio_rows, refpose_items, pose_style, fp):
    R = mel_rows.shape[0]                       # B*T rows (static)
    B = refpose_items.shape[0]
    t_frames = R // B                           # every item has T frames (asserted)

    # adaptive row tile: multiple of 128, capped at 512 and at the padded size
    r128 = pl.cdiv(R, 128) * 128
    tr = min(TR_MAX, r128)
    n_tiles = pl.cdiv(r128, tr)
    r_pad = n_tiles * tr

    # hoisted per-row bias slab [R, FUSED]:
    #   lanes   0:64  -> rexp@we2b + ratio*we2c + be2   (per frame)
    #   lanes  64:70  -> bp2
    #   lanes 128:256 -> ref_pose@wp1b + wp1c[pose_style] + bp1   (per item)
    exp_bias = (rexp_rows @ fp["we2b_p"]
                + ratio_rows * fp["we2c_p"]
                + fp["cbias_p"])                                     # [R, OUT_PAD]
    style_row = fp["wp1c"][pose_style]                               # [HP] gather
    pose_bias_items = refpose_items @ fp["wp1b"] + style_row + fp["bp1"]  # [B, HP]
    pose_bias_rows = jnp.repeat(pose_bias_items, t_frames, axis=0)   # [R, HP]
    row_bias = jnp.concatenate([exp_bias, pose_bias_rows], axis=-1)  # [R, FUSED]

    mel_p = jnp.pad(mel_rows.astype(jnp.bfloat16), ((0, r_pad - R), (0, 0)))
    bias_p = jnp.pad(row_bias, ((0, r_pad - R), (0, 0)))

    out = pl.pallas_call(
        _audio2coeff_fused_kernel,
        out_shape=jax.ShapeDtypeStruct((r_pad, OUT_PAD), jnp.float32),
        grid=(n_tiles,),
        in_specs=[
            # streamed per-row activations
            pl.BlockSpec((tr, MEL_FLAT), lambda r: (r, 0)),
            pl.BlockSpec((tr, FUSED), lambda r: (r, 0)),
            # resident weights (constant block index -> DMA'd once)
            pl.BlockSpec((MEL_FLAT, H), lambda r: (0, 0)),
            pl.BlockSpec((1, H), lambda r: (0, 0)),
            pl.BlockSpec((H, FUSED), lambda r: (0, 0)),
            pl.BlockSpec((HP, OUT_PAD), lambda r: (0, 0)),
        ],
        out_specs=pl.BlockSpec((tr, OUT_PAD), lambda r: (r, 0)),
        compiler_params=pltpu.CompilerParams(
            dimension_semantics=("parallel",)),   # v7x: 2 TCs split row tiles
    )(mel_p, bias_p, fp["we1_bf"], fp["be1"], fp["wa_bf"], fp["wp2_bf"])

    # [R, 70] = [exp | pose] (lanes 0:64 exp, 64:70 pose)
    return out[:R, :OUT_DIM]


# --------------------------------------------------------------------------
# Pure-JAX reference (f32, un-fused) for correctness checking.
# --------------------------------------------------------------------------
def _generate_one_ref(mel, ref_exp, ratio, ref_pose, style_onehot, p):
    emb = jnp.maximum(mel @ p["we1"] + p["be1"], 0.0)
    exp = emb @ p["we2a"] + ref_exp @ p["we2b"] + ratio * p["we2c"] + p["be2"]
    ph = jnp.maximum(
        emb @ p["wp1a"] + ref_pose @ p["wp1b"] + style_onehot @ p["wp1c"] + p["bp1"],
        0.0,
    )
    pose = ph @ p["wp2"] + p["bp2"]
    return jnp.concatenate([exp, pose], axis=-1)


# --------------------------------------------------------------------------
# Wrapper mirroring CustomAudio2CoeffWrapper (forward == generate).
# --------------------------------------------------------------------------
class CustomAudio2CoeffWrapperPallas:

    def __init__(self, key):
        self.params = _make_params(key)
        self.fused_params = _build_fused_params(self.params)

    def generate(self, batch, save_dir, pose_style, ref_pose_coeff_path):
        # TODO(synk): save_dir / ref_pose_coeff_path (savemat + .mat ref-pose
        # load) have no Pallas equivalent; results are returned in-memory.
        b = len(batch)
        t_frames = batch[0]["mel"].shape[0]
        assert all(it["mel"].shape[0] == t_frames for it in batch), \
            "all batch items must have the same frame count"

        mel_rows = jnp.concatenate([it["mel"] for it in batch], axis=0)       # [B*T, MEL_FLAT]
        rexp_rows = jnp.concatenate([it["ref_exp"] for it in batch], axis=0)  # [B*T, 64]
        ratio_rows = jnp.concatenate([it["ratio"] for it in batch], axis=0)   # [B*T, 1]
        refpose_items = jnp.concatenate([it["ref_pose"] for it in batch], axis=0)  # [B, 6]

        coeffs = _run_batch(mel_rows, rexp_rows, ratio_rows, refpose_items,
                            jnp.asarray(pose_style, jnp.int32),
                            self.fused_params)                                # [B*T, 70]
        coeffs = coeffs.reshape(b, t_frames, OUT_DIM)
        return [coeffs[i] for i in range(b)]

    def forward(self, batch, save_dir, pose_style, ref_pose_coeff_path):
        return self.generate(batch, save_dir, pose_style, ref_pose_coeff_path)

    __call__ = forward


if __name__ == "__main__":
    key = jax.random.PRNGKey(0)
    k_model, k_data = jax.random.split(key)

    model = CustomAudio2CoeffWrapperPallas(k_model)

    # Batch of 2 items (the module's forward loops over items; here it's batched
    # internally into a single pallas_call).
    batch = []
    for i in range(2):
        kk = jax.random.fold_in(k_data, i)
        k1, k2, k3, k4 = jax.random.split(kk, 4)
        batch.append({
            # flattened NCHW mel window [T, 1, MEL_BINS, MEL_STEPS] -> [T, MEL_FLAT]
            "mel": jax.random.normal(k1, (T, MEL_FLAT), jnp.float32),
            "ref_exp": jax.random.normal(k2, (T, EXP_DIM), jnp.float32) * 0.1,
            "ratio": jax.random.uniform(k3, (T, 1), jnp.float32),
            "ref_pose": jax.random.normal(k4, (1, POSE_DIM), jnp.float32) * 0.1,
        })

    results = model(batch, save_dir="/tmp/unused", pose_style=3,
                    ref_pose_coeff_path=None)
    results = [jax.block_until_ready(r) for r in results]

    # Numerical check vs f32 reference (kernel uses bf16 MXU operands ->
    # looser tolerance).
    style_onehot = jax.nn.one_hot(jnp.array([3]), N_STYLES, dtype=jnp.float32)
    ok = True
    for item, got in zip(batch, results):
        want = _generate_one_ref(
            item["mel"], item["ref_exp"], item["ratio"], item["ref_pose"],
            style_onehot, model.params,
        )
        ok &= bool(jnp.allclose(got, want, atol=3e-2, rtol=3e-2))
        ok &= got.shape == (T, OUT_DIM)

    if ok:
        print("KERNEL_OK")
    else:
        print("KERNEL_MISMATCH")
</pallas_src>

<mosaic_0001>
module attributes {stable_mosaic.version = 11 : i64} {
  func.func @_audio2coeff_fused_kernel(%arg0: i32, %arg1: memref<128x256xbf16, #tpu.memory_space<vmem>>, %arg2: memref<128x256xf32, #tpu.memory_space<vmem>>, %arg3: memref<256x256xbf16, #tpu.memory_space<vmem>>, %arg4: memref<1x256xf32, #tpu.memory_space<vmem>>, %arg5: memref<256x256xbf16, #tpu.memory_space<vmem>>, %arg6: memref<128x128xbf16, #tpu.memory_space<vmem>>, %arg7: memref<128x128xf32, #tpu.memory_space<vmem>>) attributes {dimension_semantics = [#tpu.dimension_semantics<parallel>], iteration_bounds = array<i64: 1>, scalar_prefetch = 0 : i64, scratch_operands = 0 : i64, tpu.core_type = #tpu.core_type<tc>, window_params = [{transform_indices = @transform_0, window_bounds = array<i64: 128, 256>}, {transform_indices = @transform_1, window_bounds = array<i64: 128, 256>}, {pipeline_mode = #tpu.pipeline_mode<synchronous>, transform_indices = @transform_2, window_bounds = array<i64: 256, 256>}, {pipeline_mode = #tpu.pipeline_mode<synchronous>, transform_indices = @transform_3, window_bounds = array<i64: 1, 256>}, {pipeline_mode = #tpu.pipeline_mode<synchronous>, transform_indices = @transform_4, window_bounds = array<i64: 256, 256>}, {pipeline_mode = #tpu.pipeline_mode<synchronous>, transform_indices = @transform_5, window_bounds = array<i64: 128, 128>}, {transform_indices = @transform_6, window_bounds = array<i64: 128, 128>}]} {
    %c0 = arith.constant 0 : index
    %c0_0 = arith.constant 0 : index
    %0 = vector.load %arg1[%c0, %c0_0] : memref<128x256xbf16, #tpu.memory_space<vmem>>, vector<128x256xbf16>
    %c0_1 = arith.constant 0 : index
    %c0_2 = arith.constant 0 : index
    %1 = vector.load %arg3[%c0_1, %c0_2] : memref<256x256xbf16, #tpu.memory_space<vmem>>, vector<256x256xbf16>
    %cst = arith.constant dense<0.000000e+00> : vector<128x256xf32>
    %2 = tpu.matmul %0, %1, %cst {dimension_numbers = #tpu.dot_dimension_numbers<[1], [0], [0], [1], [0, 0, 1, 1], [], []>} : vector<128x256xbf16>, vector<256x256xbf16>, vector<128x256xf32> -> vector<128x256xf32>
    %c0_3 = arith.constant 0 : index
    %c0_4 = arith.constant 0 : index
    %3 = vector.load %arg4[%c0_3, %c0_4] : memref<1x256xf32, #tpu.memory_space<vmem>>, vector<1x256xf32>
    %4 = vector.broadcast %3 : vector<1x256xf32> to vector<128x256xf32>
    %5 = arith.addf %2, %4 : vector<128x256xf32>
    %cst_5 = arith.constant 0.000000e+00 : f32
    %6 = vector.broadcast %cst_5 : f32 to vector<128x256xf32>
    %7 = arith.maximumf %5, %6 : vector<128x256xf32>
    %8 = arith.truncf %7 : vector<128x256xf32> to vector<128x256xbf16>
    %c0_6 = arith.constant 0 : index
    %c0_7 = arith.constant 0 : index
    %9 = vector.load %arg5[%c0_6, %c0_7] : memref<256x256xbf16, #tpu.memory_space<vmem>>, vector<256x256xbf16>
    %cst_8 = arith.constant dense<0.000000e+00> : vector<128x256xf32>
    %10 = tpu.matmul %8, %9, %cst_8 {dimension_numbers = #tpu.dot_dimension_numbers<[1], [0], [0], [1], [0, 0, 1, 1], [], []>} : vector<128x256xbf16>, vector<256x256xbf16>, vector<128x256xf32> -> vector<128x256xf32>
    %c0_9 = arith.constant 0 : index
    %c0_10 = arith.constant 0 : index
    %11 = vector.load %arg2[%c0_9, %c0_10] : memref<128x256xf32, #tpu.memory_space<vmem>>, vector<128x256xf32>
    %12 = arith.addf %10, %11 : vector<128x256xf32>
    %13 = vector.extract_strided_slice %12 {offsets = [0, 128], sizes = [128, 128], strides = [1, 1]} : vector<128x256xf32> to vector<128x128xf32>
    %cst_11 = arith.constant 0.000000e+00 : f32
    %14 = vector.broadcast %cst_11 : f32 to vector<128x128xf32>
    %15 = arith.maximumf %13, %14 : vector<128x128xf32>
    %16 = vector.extract_strided_slice %12 {offsets = [0, 0], sizes = [128, 128], strides = [1, 1]} : vector<128x256xf32> to vector<128x128xf32>
    %17 = arith.truncf %15 : vector<128x128xf32> to vector<128x128xbf16>
    %c0_12 = arith.constant 0 : index
    %c0_13 = arith.constant 0 : index
    %18 = vector.load %arg6[%c0_12, %c0_13] : memref<128x128xbf16, #tpu.memory_space<vmem>>, vector<128x128xbf16>
    %cst_14 = arith.constant dense<0.000000e+00> : vector<128x128xf32>
    %19 = tpu.matmul %17, %18, %cst_14 {dimension_numbers = #tpu.dot_dimension_numbers<[1], [0], [0], [1], [0, 0, 1, 1], [], []>} : vector<128x128xbf16>, vector<128x128xbf16>, vector<128x128xf32> -> vector<128x128xf32>
    %20 = arith.addf %16, %19 : vector<128x128xf32>
    %c0_15 = arith.constant 0 : index
    %c0_16 = arith.constant 0 : index
    %21 = vector.load %arg7[%c0_15, %c0_16] : memref<128x128xf32, #tpu.memory_space<vmem>>, vector<128x128xf32>
    tpu.vector_store %arg7[%c0_15, %c0_16], %20 {strides = array<i32>} : memref<128x128xf32, #tpu.memory_space<vmem>>, vector<128x128xf32>,
    return
  }
  func.func @transform_0(%arg0: i32) -> (i32, i32) {
    %c0_i32 = arith.constant 0 : i32
    %c0_i32_0 = arith.constant 0 : i32
    return %arg0, %c0_i32 : i32, i32
  }
  func.func @transform_1(%arg0: i32) -> (i32, i32) {
    %c0_i32 = arith.constant 0 : i32
    %c0_i32_0 = arith.constant 0 : i32
    return %arg0, %c0_i32 : i32, i32
  }
  func.func @transform_2(%arg0: i32) -> (i32, i32) {
    %c0_i32 = arith.constant 0 : i32
    %c0_i32_0 = arith.constant 0 : i32
    %c0_i32_1 = arith.constant 0 : i32
    return %c0_i32, %c0_i32_0 : i32, i32
  }
  func.func @transform_3(%arg0: i32) -> (i32, i32) {
    %c0_i32 = arith.constant 0 : i32
    %c0_i32_0 = arith.constant 0 : i32
    %c0_i32_1 = arith.constant 0 : i32
    return %c0_i32, %c0_i32_0 : i32, i32
  }
  func.func @transform_4(%arg0: i32) -> (i32, i32) {
    %c0_i32 = arith.constant 0 : i32
    %c0_i32_0 = arith.constant 0 : i32
    %c0_i32_1 = arith.constant 0 : i32
    return %c0_i32, %c0_i32_0 : i32, i32
  }
  func.func @transform_5(%arg0: i32) -> (i32, i32) {
    %c0_i32 = arith.constant 0 : i32
    %c0_i32_0 = arith.constant 0 : i32
    %c0_i32_1 = arith.constant 0 : i32
    return %c0_i32, %c0_i32_0 : i32, i32
  }
  func.func @transform_6(%arg0: i32) -> (i32, i32) {
    %c0_i32 = arith.constant 0 : i32
    %c0_i32_0 = arith.constant 0 : i32
    return %arg0, %c0_i32 : i32, i32
  }
}

</mosaic_0001>

<llo_original>
// kernel: _run_batch.1
$region0: #{_run_batch.1}
  #allocation0 [shape = 'u32[]', space=smem, size = 0x4, offset = 0x4, fixed_abs, tag = 'smem constant byte address 0x4 - core index']
  #allocation1 [shape = 'u32[144,128]{1,0:T(1,128)}', space=vmem, size = 0x12000, scoped, tag = 'internal scratch']
  %s0 = inlined_call_operand.vmem [shape: bf16[128,256], index: 0, kind: input, shape index: {}]
  %s1 = inlined_call_operand.vmem [shape: f32[128,256], index: 1, kind: input, shape index: {}]
  %s2 = inlined_call_operand.vmem [shape: bf16[256,256], index: 2, kind: input, shape index: {}]
  %s3 = inlined_call_operand.vmem [shape: f32[1,256], index: 3, kind: input, shape index: {}]
  %s4 = inlined_call_operand.vmem [shape: bf16[256,256], index: 4, kind: input, shape index: {}]
  %s5 = inlined_call_operand.vmem [shape: bf16[128,128], index: 5, kind: input, shape index: {}]
  %s6 = inlined_call_operand.vmem [shape: f32[128,128], index: 6, kind: output, shape index: {}]
  %s7 = sld [smem:[#allocation0]]
  $region34: #{_run_batch.1} parent=0
    _
  %s9 = ssub.s32 1, %s7
  %s10 = scalar_select 0, %s9, %s7
  // Predicated region
  $region2: #{_run_batch.1} parent=0 // pred_check
    _
  $region3: #{_run_batch.1} parent=0 // pred_check_branch
    %12 = sbr.rel (0) target = $region5
  $region4: #{_run_batch.1} parent=0 // pred_region
    _
  $region5: #{_run_batch.1} parent=0 // pred_fallthru
    _
  // Predicated region
  $region6: #{_run_batch.1} parent=0 // pred_check
    _
  $region7: #{_run_batch.1} parent=0 // pred_check_branch
    %14 = sbr.rel (0) target = $region9
  $region8: #{_run_batch.1} parent=0 // pred_region
    _
  $region9: #{_run_batch.1} parent=0 // pred_fallthru
    _
  // Predicated region
  $region10: #{_run_batch.1} parent=0 // pred_check
    _
  $region11: #{_run_batch.1} parent=0 // pred_check_branch
    %16 = sbr.rel (0) target = $region13
  $region12: #{_run_batch.1} parent=0 // pred_region
    _
  $region13: #{_run_batch.1} parent=0 // pred_fallthru
    _
  // Predicated region
  $region14: #{_run_batch.1} parent=0 // pred_check
    _
  $region15: #{_run_batch.1} parent=0 // pred_check_branch
    %18 = sbr.rel (0) target = $region17
  $region16: #{_run_batch.1} parent=0 // pred_region
    _
  $region17: #{_run_batch.1} parent=0 // pred_fallthru
    _
  // Predicated region
  $region18: #{_run_batch.1} parent=0 // pred_check
    _
  $region19: #{_run_batch.1} parent=0 // pred_check_branch
    %20 = sbr.rel (0) target = $region21
  $region20: #{_run_batch.1} parent=0 // pred_region
    _
  $region21: #{_run_batch.1} parent=0 // pred_fallthru
    _
  // Predicated region
  $region22: #{_run_batch.1} parent=0 // pred_check
    _
  $region23: #{_run_batch.1} parent=0 // pred_check_branch
    %22 = sbr.rel (0) target = $region25
  $region24: #{_run_batch.1} parent=0 // pred_region
    _
  $region25: #{_run_batch.1} parent=0 // pred_fallthru
    _
  %v24 = vld [vmem:[%s0] sm:$0xff]
  %v25 = vld [vmem:[%s0 + $0x8] sm:$0xff]
  %v26 = vld [vmem:[%s0 + $0x10] sm:$0xff]
  %v27 = vld [vmem:[%s0 + $0x18] sm:$0xff]
  %v28 = vld [vmem:[%s0 + $0x20] sm:$0xff]
  %v29 = vld [vmem:[%s0 + $0x28] sm:$0xff]
  %v30 = vld [vmem:[%s0 + $0x30] sm:$0xff]
  %v31 = vld [vmem:[%s0 + $0x38] sm:$0xff]
  %v32 = vld [vmem:[%s0 + $0x40] sm:$0xff]
  %v33 = vld [vmem:[%s0 + $0x48] sm:$0xff]
  %v34 = vld [vmem:[%s0 + $0x50] sm:$0xff]
  %v35 = vld [vmem:[%s0 + $0x58] sm:$0xff]
  %v36 = vld [vmem:[%s0 + $0x60] sm:$0xff]
  %v37 = vld [vmem:[%s0 + $0x68] sm:$0xff]
  %v38 = vld [vmem:[%s0 + $0x70] sm:$0xff]
  %v39 = vld [vmem:[%s0 + $0x78] sm:$0xff]
  %v40 = vld [vmem:[%s2] sm:$0xff]
  %v41 = vld [vmem:[%s2 + $0x8] sm:$0xff]
  %v42 = vld [vmem:[%s2 + $0x10] sm:$0xff]
  %v43 = vld [vmem:[%s2 + $0x18] sm:$0xff]
  %v44 = vld [vmem:[%s2 + $0x20] sm:$0xff]
  %v45 = vld [vmem:[%s2 + $0x28] sm:$0xff]
  %v46 = vld [vmem:[%s2 + $0x30] sm:$0xff]
  %v47 = vld [vmem:[%s2 + $0x38] sm:$0xff]
  %v48 = vld [vmem:[%s2 + $0x40] sm:$0xff]
  %v49 = vld [vmem:[%s2 + $0x48] sm:$0xff]
  %v50 = vld [vmem:[%s2 + $0x50] sm:$0xff]
  %v51 = vld [vmem:[%s2 + $0x58] sm:$0xff]
  %v52 = vld [vmem:[%s2 + $0x60] sm:$0xff]
  %v53 = vld [vmem:[%s2 + $0x68] sm:$0xff]
  %v54 = vld [vmem:[%s2 + $0x70] sm:$0xff]
  %v55 = vld [vmem:[%s2 + $0x78] sm:$0xff]
  %v56 = vld [vmem:[%s2 + $0x80] sm:$0xff]
  %v57 = vld [vmem:[%s2 + $0x88] sm:$0xff]
  %v58 = vld [vmem:[%s2 + $0x90] sm:$0xff]
  %v59 = vld [vmem:[%s2 + $0x98] sm:$0xff]
  %v60 = vld [vmem:[%s2 + $0xa0] sm:$0xff]
  %v61 = vld [vmem:[%s2 + $0xa8] sm:$0xff]
  %v62 = vld [vmem:[%s2 + $0xb0] sm:$0xff]
  %v63 = vld [vmem:[%s2 + $0xb8] sm:$0xff]
  %v64 = vld [vmem:[%s2 + $0xc0] sm:$0xff]
  %v65 = vld [vmem:[%s2 + $0xc8] sm:$0xff]
  %v66 = vld [vmem:[%s2 + $0xd0] sm:$0xff]
  %v67 = vld [vmem:[%s2 + $0xd8] sm:$0xff]
  %v68 = vld [vmem:[%s2 + $0xe0] sm:$0xff]
  %v69 = vld [vmem:[%s2 + $0xe8] sm:$0xff]
  %v70 = vld [vmem:[%s2 + $0xf0] sm:$0xff]
  %v71 = vld [vmem:[%s2 + $0xf8] sm:$0xff]
  %v72 = vld [vmem:[%s3] sm:$0x3]
  %v74 = vlaneseq
  %v75 = vshrl.u32 %v74, 7
  %v76 = vsub.s32 0, %v75
  %v77 = vrot.slane %v72, %v76
  %v78 = vlaneseq
  %v79 = vshrl.u32 %v78, 7
  %v80 = vsub.s32 1, %v79
  %v81 = vrot.slane %v72, %v80
  %v100 = vunpack.c.l.b16 %v24
  %v101 = vunpack.c.h.b16 %v24
  %v102 = vunpack.c.l.b16 %v25
  %v103 = vunpack.c.h.b16 %v25
  %v104 = vunpack.c.l.b16 %v26
  %v105 = vunpack.c.h.b16 %v26
  %v106 = vunpack.c.l.b16 %v27
  %v107 = vunpack.c.h.b16 %v27
  %v108 = vunpack.c.l.b16 %v28
  %v109 = vunpack.c.h.b16 %v28
  %v110 = vunpack.c.l.b16 %v29
  %v111 = vunpack.c.h.b16 %v29
  %v112 = vunpack.c.l.b16 %v30
  %v113 = vunpack.c.h.b16 %v30
  %v114 = vunpack.c.l.b16 %v31
  %v115 = vunpack.c.h.b16 %v31
  %v116 = vunpack.c.l.b16 %v32
  %v117 = vunpack.c.h.b16 %v32
  %v118 = vunpack.c.l.b16 %v33
  %v119 = vunpack.c.h.b16 %v33
  %v120 = vunpack.c.l.b16 %v34
  %v121 = vunpack.c.h.b16 %v34
  %v122 = vunpack.c.l.b16 %v35
  %v123 = vunpack.c.h.b16 %v35
  %v124 = vunpack.c.l.b16 %v36
  %v125 = vunpack.c.h.b16 %v36
  %v126 = vunpack.c.l.b16 %v37
  %v127 = vunpack.c.h.b16 %v37
  %v128 = vunpack.c.l.b16 %v38
  %v129 = vunpack.c.h.b16 %v38
  %v130 = vunpack.c.l.b16 %v39
  %v131 = vunpack.c.h.b16 %v39
  %v132 = vpack.c.b16 %v102, %v100
  %v133 = vpack.c.b16 %v103, %v101
  %v134 = vpack.c.b16 %v106, %v104
  %v135 = vpack.c.b16 %v107, %v105
  %v136 = vpack.c.b16 %v110, %v108
  %v137 = vpack.c.b16 %v111, %v109
  %v138 = vpack.c.b16 %v114, %v112
  %v139 = vpack.c.b16 %v115, %v113
  %v140 = vpack.c.b16 %v118, %v116
  %v141 = vpack.c.b16 %v119, %v117
  %v142 = vpack.c.b16 %v122, %v120
  %v143 = vpack.c.b16 %v123, %v121
  %v144 = vpack.c.b16 %v126, %v124
  %v145 = vpack.c.b16 %v127, %v125
  %v146 = vpack.c.b16 %v130, %v128
  %v147 = vpack.c.b16 %v131, %v129
  %v196 = vunpack.c.l.b16 %v40
  %v197 = vunpack.c.h.b16 %v40
  %v198 = vunpack.c.l.b16 %v41
  %v199 = vunpack.c.h.b16 %v41
  %v200 = vunpack.c.l.b16 %v42
  %v201 = vunpack.c.h.b16 %v42
  %v202 = vunpack.c.l.b16 %v43
  %v203 = vunpack.c.h.b16 %v43
  %v204 = vunpack.c.l.b16 %v44
  %v205 = vunpack.c.h.b16 %v44
  %v206 = vunpack.c.l.b16 %v45
  %v207 = vunpack.c.h.b16 %v45
  %v208 = vunpack.c.l.b16 %v46
  %v209 = vunpack.c.h.b16 %v46
  %v210 = vunpack.c.l.b16 %v47
  %v211 = vunpack.c.h.b16 %v47
  %v212 = vunpack.c.l.b16 %v48
  %v213 = vunpack.c.h.b16 %v48
  %v214 = vunpack.c.l.b16 %v49
  %v215 = vunpack.c.h.b16 %v49
  %v216 = vunpack.c.l.b16 %v50
  %v217 = vunpack.c.h.b16 %v50
  %v218 = vunpack.c.l.b16 %v51
  %v219 = vunpack.c.h.b16 %v51
  %v220 = vunpack.c.l.b16 %v52
  %v221 = vunpack.c.h.b16 %v52
  %v222 = vunpack.c.l.b16 %v53
  %v223 = vunpack.c.h.b16 %v53
  %v224 = vunpack.c.l.b16 %v54
  %v225 = vunpack.c.h.b16 %v54
  %v226 = vunpack.c.l.b16 %v55
  %v227 = vunpack.c.h.b16 %v55
  %v228 = vunpack.c.l.b16 %v56
  %v229 = vunpack.c.h.b16 %v56
  %v230 = vunpack.c.l.b16 %v57
  %v231 = vunpack.c.h.b16 %v57
  %v232 = vunpack.c.l.b16 %v58
  %v233 = vunpack.c.h.b16 %v58
  %v234 = vunpack.c.l.b16 %v59
  %v235 = vunpack.c.h.b16 %v59
  %v236 = vunpack.c.l.b16 %v60
  %v237 = vunpack.c.h.b16 %v60
  %v238 = vunpack.c.l.b16 %v61
  %v239 = vunpack.c.h.b16 %v61
  %v240 = vunpack.c.l.b16 %v62
  %v241 = vunpack.c.h.b16 %v62
  %v242 = vunpack.c.l.b16 %v63
  %v243 = vunpack.c.h.b16 %v63
  %v244 = vunpack.c.l.b16 %v64
  %v245 = vunpack.c.h.b16 %v64
  %v246 = vunpack.c.l.b16 %v65
  %v247 = vunpack.c.h.b16 %v65
  %v248 = vunpack.c.l.b16 %v66
  %v249 = vunpack.c.h.b16 %v66
  %v250 = vunpack.c.l.b16 %v67
  %v251 = vunpack.c.h.b16 %v67
  %v252 = vunpack.c.l.b16 %v68
  %v253 = vunpack.c.h.b16 %v68
  %v254 = vunpack.c.l.b16 %v69
  %v255 = vunpack.c.h.b16 %v69
  %v256 = vunpack.c.l.b16 %v70
  %v257 = vunpack.c.h.b16 %v70
  %v258 = vunpack.c.l.b16 %v71
  %v259 = vunpack.c.h.b16 %v71
  %v260 = vpack.c.b16 %v198, %v196
  %v261 = vpack.c.b16 %v199, %v197
  %v262 = vpack.c.b16 %v202, %v200
  %v263 = vpack.c.b16 %v203, %v201
  %v264 = vpack.c.b16 %v206, %v204
  %v265 = vpack.c.b16 %v207, %v205
  %v266 = vpack.c.b16 %v210, %v208
  %v267 = vpack.c.b16 %v211, %v209
  %v268 = vpack.c.b16 %v214, %v212
  %v269 = vpack.c.b16 %v215, %v213
  %v270 = vpack.c.b16 %v218, %v216
  %v271 = vpack.c.b16 %v219, %v217
  %v272 = vpack.c.b16 %v222, %v220
  %v273 = vpack.c.b16 %v223, %v221
  %v274 = vpack.c.b16 %v226, %v224
  %v275 = vpack.c.b16 %v227, %v225
  %v276 = vpack.c.b16 %v230, %v228
  %v277 = vpack.c.b16 %v231, %v229
  %v278 = vpack.c.b16 %v234, %v232
  %v279 = vpack.c.b16 %v235, %v233
  %v280 = vpack.c.b16 %v238, %v236
  %v281 = vpack.c.b16 %v239, %v237
  %v282 = vpack.c.b16 %v242, %v240
  %v283 = vpack.c.b16 %v243, %v241
  %v284 = vpack.c.b16 %v246, %v244
  %v285 = vpack.c.b16 %v247, %v245
  %v286 = vpack.c.b16 %v250, %v248
  %v287 = vpack.c.b16 %v251, %v249
  %v288 = vpack.c.b16 %v254, %v252
  %v289 = vpack.c.b16 %v255, %v253
  %v290 = vpack.c.b16 %v258, %v256
  %v291 = vpack.c.b16 %v259, %v257
  %324 = vmatprep.subr.bf16.mxu0 %v261
  %325 = vmatpush1.bf16.msra.mxu0 %v260
  %326 = vmatprep.subr.bf16.mxu0 %v263
  %327 = vmatpush1.bf16.msra.mxu0 %v262
  %328 = vmatprep.subr.bf16.mxu0 %v265
  %329 = vmatpush1.bf16.msra.mxu0 %v264
  %330 = vmatprep.subr.bf16.mxu0 %v267
  %331 = vmatpush1.bf16.msra.mxu0 %v266
  %332 = vmatprep.subr.bf16.mxu0 %v269
  %333 = vmatpush1.bf16.msra.mxu0 %v268
  %334 = vmatprep.subr.bf16.mxu0 %v271
  %335 = vmatpush1.bf16.msra.mxu0 %v270
  %336 = vmatprep.subr.bf16.mxu0 %v273
  %337 = vmatpush1.bf16.msra.mxu0 %v272
  %338 = vmatprep.subr.bf16.mxu0 %v275
  %339 = vmatpush1.bf16.msra.mxu0 %v274
  %340 = vmatprep.subr.bf16.mxu0 %v277
  %341 = vmatpush1.bf16.msra.mxu0 %v276
  %342 = vmatprep.subr.bf16.mxu0 %v279
  %343 = vmatpush1.bf16.msra.mxu0 %v278
  %344 = vmatprep.subr.bf16.mxu0 %v281
  %345 = vmatpush1.bf16.msra.mxu0 %v280
  %346 = vmatprep.subr.bf16.mxu0 %v283
  %347 = vmatpush1.bf16.msra.mxu0 %v282
  %348 = vmatprep.subr.bf16.mxu0 %v285
  %349 = vmatpush1.bf16.msra.mxu0 %v284
  %350 = vmatprep.subr.bf16.mxu0 %v287
  %351 = vmatpush1.bf16.msra.mxu0 %v286
  %352 = vmatprep.subr.bf16.mxu0 %v289
  %353 = vmatpush1.bf16.msra.mxu0 %v288
  %354 = vmatprep.subr.bf16.mxu0 %v291
  %355 = vmatpush1.bf16.msra.mxu0 %v290
  %356 = vmatprep.mubr.bf16.mxu0 %v133
  %357 = vmatmul.mubr.bf16.gmra.mrb[0].mxu0 %v132
  %v358 = vpop.f32.mrb[0].mxu0
  %v359 = vadd.f32 %v77, %v358
  %v360 = vpop.f32.mrb[0].mxu0
  %v361 = vadd.f32 %v81, %v360
  %v362 = vpop.f32.mrb[0].mxu0
  %v363 = vadd.f32 %v77, %v362
  %v364 = vpop.f32.mrb[0].mxu0
  %v365 = vadd.f32 %v81, %v364
  %366 = vmatprep.mubr.bf16.mxu0 %v135
  %367 = vmatmul.mubr.bf16.gmra.mrb[0].mxu0 %v134
  %v368 = vpop.f32.mrb[0].mxu0
  %v369 = vadd.f32 %v77, %v368
  %v370 = vpop.f32.mrb[0].mxu0
  %v371 = vadd.f32 %v81, %v370
  %v372 = vpop.f32.mrb[0].mxu0
  %v373 = vadd.f32 %v77, %v372
  %v374 = vpop.f32.mrb[0].mxu0
  %v375 = vadd.f32 %v81, %v374
  %376 = vmatprep.mubr.bf16.mxu0 %v137
  %377 = vmatmul.mubr.bf16.gmra.mrb[0].mxu0 %v136
  %v378 = vpop.f32.mrb[0].mxu0
  %v379 = vadd.f32 %v77, %v378
  %v380 = vpop.f32.mrb[0].mxu0
  %v381 = vadd.f32 %v81, %v380
  %v382 = vpop.f32.mrb[0].mxu0
  %v383 = vadd.f32 %v77, %v382
  %v384 = vpop.f32.mrb[0].mxu0
  %v385 = vadd.f32 %v81, %v384
  %386 = vmatprep.mubr.bf16.mxu0 %v139
  %387 = vmatmul.mubr.bf16.gmra.mrb[0].mxu0 %v138
  %v388 = vpop.f32.mrb[0].mxu0
  %v389 = vadd.f32 %v77, %v388
  %v390 = vpop.f32.mrb[0].mxu0
  %v391 = vadd.f32 %v81, %v390
  %v392 = vpop.f32.mrb[0].mxu0
  %v393 = vadd.f32 %v77, %v392
  %v394 = vpop.f32.mrb[0].mxu0
  %v395 = vadd.f32 %v81, %v394
  %396 = vmatprep.mubr.bf16.mxu0 %v141
  %397 = vmatmul.mubr.bf16.gmra.mrb[0].mxu0 %v140
  %v398 = vpop.f32.mrb[0].mxu0
  %v399 = vadd.f32 %v77, %v398
  %v400 = vpop.f32.mrb[0].mxu0
  %v401 = vadd.f32 %v81, %v400
  %v402 = vpop.f32.mrb[0].mxu0
  %v403 = vadd.f32 %v77, %v402
  %v404 = vpop.f32.mrb[0].mxu0
  %v405 = vadd.f32 %v81, %v404
  %406 = vmatprep.mubr.bf16.mxu0 %v143
  %407 = vmatmul.mubr.bf16.gmra.mrb[0].mxu0 %v142
  %v408 = vpop.f32.mrb[0].mxu0
  %v409 = vadd.f32 %v77, %v408
  %v410 = vpop.f32.mrb[0].mxu0
  %v411 = vadd.f32 %v81, %v410
  %v412 = vpop.f32.mrb[0].mxu0
  %v413 = vadd.f32 %v77, %v412
  %v414 = vpop.f32.mrb[0].mxu0
  %v415 = vadd.f32 %v81, %v414
  %416 = vmatprep.mubr.bf16.mxu0 %v145
  %417 = vmatmul.mubr.bf16.gmra.mrb[0].mxu0 %v144
  %v418 = vpop.f32.mrb[0].mxu0
  %v419 = vadd.f32 %v77, %v418
  %v420 = vpop.f32.mrb[0].mxu0
  %v421 = vadd.f32 %v81, %v420
  %v422 = vpop.f32.mrb[0].mxu0
  %v423 = vadd.f32 %v77, %v422
  %v424 = vpop.f32.mrb[0].mxu0
  %v425 = vadd.f32 %v81, %v424
  %426 = vmatprep.mubr.bf16.mxu0 %v147
  %427 = vmatmul.mubr.bf16.gmra.mrb[0].mxu0 %v146
  %v428 = vpop.f32.mrb[0].mxu0
  %v429 = vadd.f32 %v77, %v428
  %v430 = vpop.f32.mrb[0].mxu0
  %v431 = vadd.f32 %v81, %v430
  %v432 = vpop.f32.mrb[0].mxu0
  %v433 = vadd.f32 %v77, %v432
  %v434 = vpop.f32.mrb[0].mxu0
  %v435 = vadd.f32 %v81, %v434
  %436 = vdwg.mxu0
  %v437 = vmax.f32 %v359, 0.0
  %v438 = vmax.f32 %v361, 0.0
  %v439 = vmax.f32 %v363, 0.0
  %v440 = vmax.f32 %v365, 0.0
  %v441 = vmax.f32 %v369, 0.0
  %v442 = vmax.f32 %v371, 0.0
  %v443 = vmax.f32 %v373, 0.0
  %v444 = vmax.f32 %v375, 0.0
  %v445 = vmax.f32 %v379, 0.0
  %v446 = vmax.f32 %v381, 0.0
  %v447 = vmax.f32 %v383, 0.0
  %v448 = vmax.f32 %v385, 0.0
  %v449 = vmax.f32 %v389, 0.0
  %v450 = vmax.f32 %v391, 0.0
  %v451 = vmax.f32 %v393, 0.0
  %v452 = vmax.f32 %v395, 0.0
  %v453 = vmax.f32 %v399, 0.0
  %v454 = vmax.f32 %v401, 0.0
  %v455 = vmax.f32 %v403, 0.0
  %v456 = vmax.f32 %v405, 0.0
  %v457 = vmax.f32 %v409, 0.0
  %v458 = vmax.f32 %v411, 0.0
  %v459 = vmax.f32 %v413, 0.0
  %v460 = vmax.f32 %v415, 0.0
  %v461 = vmax.f32 %v419, 0.0
  %v462 = vmax.f32 %v421, 0.0
  %v463 = vmax.f32 %v423, 0.0
  %v464 = vmax.f32 %v425, 0.0
  %v465 = vmax.f32 %v429, 0.0
  %v466 = vmax.f32 %v431, 0.0
  %v467 = vmax.f32 %v433, 0.0
  %v468 = vmax.f32 %v435, 0.0
  %v469 = vpack.c.bf16 %v439, %v437
  %v470 = vpack.c.bf16 %v440, %v438
  %v471 = vpack.c.bf16 %v443, %v441
  %v472 = vpack.c.bf16 %v444, %v442
  %v473 = vpack.c.bf16 %v447, %v445
  %v474 = vpack.c.bf16 %v448, %v446
  %v475 = vpack.c.bf16 %v451, %v449
  %v476 = vpack.c.bf16 %v452, %v450
  %v477 = vpack.c.bf16 %v455, %v453
  %v478 = vpack.c.bf16 %v456, %v454
  %v479 = vpack.c.bf16 %v459, %v457
  %v480 = vpack.c.bf16 %v460, %v458
  %v481 = vpack.c.bf16 %v463, %v461
  %v482 = vpack.c.bf16 %v464, %v462
  %v483 = vpack.c.bf16 %v467, %v465
  %v484 = vpack.c.bf16 %v468, %v466
  %v485 = vld [vmem:[%s4] sm:$0xff]
  %v486 = vld [vmem:[%s4 + $0x8] sm:$0xff]
  %v487 = vld [vmem:[%s4 + $0x10] sm:$0xff]
  %v488 = vld [vmem:[%s4 + $0x18] sm:$0xff]
  %v489 = vld [vmem:[%s4 + $0x20] sm:$0xff]
  %v490 = vld [vmem:[%s4 + $0x28] sm:$0xff]
  %v491 = vld [vmem:[%s4 + $0x30] sm:$0xff]
  %v492 = vld [vmem:[%s4 + $0x38] sm:$0xff]
  %v493 = vld [vmem:[%s4 + $0x40] sm:$0xff]
  %v494 = vld [vmem:[%s4 + $0x48] sm:$0xff]
  %v495 = vld [vmem:[%s4 + $0x50] sm:$0xff]
  %v496 = vld [vmem:[%s4 + $0x58] sm:$0xff]
  %v497 = vld [vmem:[%s4 + $0x60] sm:$0xff]
  %v498 = vld [vmem:[%s4 + $0x68] sm:$0xff]
  %v499 = vld [vmem:[%s4 + $0x70] sm:$0xff]
  %v500 = vld [vmem:[%s4 + $0x78] sm:$0xff]
  %v501 = vld [vmem:[%s4 + $0x80] sm:$0xff]
  %v502 = vld [vmem:[%s4 + $0x88] sm:$0xff]
  %v503 = vld [vmem:[%s4 + $0x90] sm:$0xff]
  %v504 = vld [vmem:[%s4 + $0x98] sm:$0xff]
  %v505 = vld [vmem:[%s4 + $0xa0] sm:$0xff]
  %v506 = vld [vmem:[%s4 + $0xa8] sm:$0xff]
  %v507 = vld [vmem:[%s4 + $0xb0] sm:$0xff]
  %v508 = vld [vmem:[%s4 + $0xb8] sm:$0xff]
  %v509 = vld [vmem:[%s4 + $0xc0] sm:$0xff]
  %v510 = vld [vmem:[%s4 + $0xc8] sm:$0xff]
  %v511 = vld [vmem:[%s4 + $0xd0] sm:$0xff]
  %v512 = vld [vmem:[%s4 + $0xd8] sm:$0xff]
  %v513 = vld [vmem:[%s4 + $0xe0] sm:$0xff]
  %v514 = vld [vmem:[%s4 + $0xe8] sm:$0xff]
  %v515 = vld [vmem:[%s4 + $0xf0] sm:$0xff]
  %v516 = vld [vmem:[%s4 + $0xf8] sm:$0xff]
  %v517 = vld [vmem:[%s1] sm:$0xff]
  %v518 = vld [vmem:[%s1 + $0x8] sm:$0xff]
  %v519 = vld [vmem:[%s1 + $0x10] sm:$0xff]
  %v520 = vld [vmem:[%s1 + $0x18] sm:$0xff]
  %v521 = vld [vmem:[%s1 + $0x20] sm:$0xff]
  %v522 = vld [vmem:[%s1 + $0x28] sm:$0xff]
  %v523 = vld [vmem:[%s1 + $0x30] sm:$0xff]
  %v524 = vld [vmem:[%s1 + $0x38] sm:$0xff]
  %v525 = vld [vmem:[%s1 + $0x40] sm:$0xff]
  %v526 = vld [vmem:[%s1 + $0x48] sm:$0xff]
  %v527 = vld [vmem:[%s1 + $0x50] sm:$0xff]
  %v528 = vld [vmem:[%s1 + $0x58] sm:$0xff]
  %v529 = vld [vmem:[%s1 + $0x60] sm:$0xff]
  %v530 = vld [vmem:[%s1 + $0x68] sm:$0xff]
  %v531 = vld [vmem:[%s1 + $0x70] sm:$0xff]
  %v532 = vld [vmem:[%s1 + $0x78] sm:$0xff]
  %v533 = vld [vmem:[%s1 + $0x80] sm:$0xff]
  %v534 = vld [vmem:[%s1 + $0x88] sm:$0xff]
  %v535 = vld [vmem:[%s1 + $0x90] sm:$0xff]
  %v536 = vld [vmem:[%s1 + $0x98] sm:$0xff]
  %v537 = vld [vmem:[%s1 + $0xa0] sm:$0xff]
  %v538 = vld [vmem:[%s1 + $0xa8] sm:$0xff]
  %v539 = vld [vmem:[%s1 + $0xb0] sm:$0xff]
  %v540 = vld [vmem:[%s1 + $0xb8] sm:$0xff]
  %v541 = vld [vmem:[%s1 + $0xc0] sm:$0xff]
  %v542 = vld [vmem:[%s1 + $0xc8] sm:$0xff]
  %v543 = vld [vmem:[%s1 + $0xd0] sm:$0xff]
  %v544 = vld [vmem:[%s1 + $0xd8] sm:$0xff]
  %v545 = vld [vmem:[%s1 + $0xe0] sm:$0xff]
  %v546 = vld [vmem:[%s1 + $0xe8] sm:$0xff]
  %v547 = vld [vmem:[%s1 + $0xf0] sm:$0xff]
  %v548 = vld [vmem:[%s1 + $0xf8] sm:$0xff]
  %v581 = vunpack.c.l.b16 %v485
  %v582 = vunpack.c.h.b16 %v485
  %v583 = vunpack.c.l.b16 %v486
  %v584 = vunpack.c.h.b16 %v486
  %v585 = vunpack.c.l.b16 %v487
  %v586 = vunpack.c.h.b16 %v487
  %v587 = vunpack.c.l.b16 %v488
  %v588 = vunpack.c.h.b16 %v488
  %v589 = vunpack.c.l.b16 %v489
  %v590 = vunpack.c.h.b16 %v489
  %v591 = vunpack.c.l.b16 %v490
  %v592 = vunpack.c.h.b16 %v490
  %v593 = vunpack.c.l.b16 %v491
  %v594 = vunpack.c.h.b16 %v491
  %v595 = vunpack.c.l.b16 %v492
  %v596 = vunpack.c.h.b16 %v492
  %v597 = vunpack.c.l.b16 %v493
  %v598 = vunpack.c.h.b16 %v493
  %v599 = vunpack.c.l.b16 %v494
  %v600 = vunpack.c.h.b16 %v494
  %v601 = vunpack.c.l.b16 %v495
  %v602 = vunpack.c.h.b16 %v495
  %v603 = vunpack.c.l.b16 %v496
  %v604 = vunpack.c.h.b16 %v496
  %v605 = vunpack.c.l.b16 %v497
  %v606 = vunpack.c.h.b16 %v497
  %v607 = vunpack.c.l.b16 %v498
  %v608 = vunpack.c.h.b16 %v498
  %v609 = vunpack.c.l.b16 %v499
  %v610 = vunpack.c.h.b16 %v499
  %v611 = vunpack.c.l.b16 %v500
  %v612 = vunpack.c.h.b16 %v500
  %v613 = vunpack.c.l.b16 %v501
  %v614 = vunpack.c.h.b16 %v501
  %v615 = vunpack.c.l.b16 %v502
  %v616 = vunpack.c.h.b16 %v502
  %v617 = vunpack.c.l.b16 %v503
  %v618 = vunpack.c.h.b16 %v503
  %v619 = vunpack.c.l.b16 %v504
  %v620 = vunpack.c.h.b16 %v504
  %v621 = vunpack.c.l.b16 %v505
  %v622 = vunpack.c.h.b16 %v505
  %v623 = vunpack.c.l.b16 %v506
  %v624 = vunpack.c.h.b16 %v506
  %v625 = vunpack.c.l.b16 %v507
  %v626 = vunpack.c.h.b16 %v507
  %v627 = vunpack.c.l.b16 %v508
  %v628 = vunpack.c.h.b16 %v508
  %v629 = vunpack.c.l.b16 %v509
  %v630 = vunpack.c.h.b16 %v509
  %v631 = vunpack.c.l.b16 %v510
  %v632 = vunpack.c.h.b16 %v510
  %v633 = vunpack.c.l.b16 %v511
  %v634 = vunpack.c.h.b16 %v511
  %v635 = vunpack.c.l.b16 %v512
  %v636 = vunpack.c.h.b16 %v512
  %v637 = vunpack.c.l.b16 %v513
  %v638 = vunpack.c.h.b16 %v513
  %v639 = vunpack.c.l.b16 %v514
  %v640 = vunpack.c.h.b16 %v514
  %v641 = vunpack.c.l.b16 %v515
  %v642 = vunpack.c.h.b16 %v515
  %v643 = vunpack.c.l.b16 %v516
  %v644 = vunpack.c.h.b16 %v516
  %v645 = vpack.c.b16 %v583, %v581
  %v646 = vpack.c.b16 %v584, %v582
  %v647 = vpack.c.b16 %v587, %v585
  %v648 = vpack.c.b16 %v588, %v586
  %v649 = vpack.c.b16 %v591, %v589
  %v650 = vpack.c.b16 %v592, %v590
  %v651 = vpack.c.b16 %v595, %v593
  %v652 = vpack.c.b16 %v596, %v594
  %v653 = vpack.c.b16 %v599, %v597
  %v654 = vpack.c.b16 %v600, %v598
  %v655 = vpack.c.b16 %v603, %v601
  %v656 = vpack.c.b16 %v604, %v602
  %v657 = vpack.c.b16 %v607, %v605
  %v658 = vpack.c.b16 %v608, %v606
  %v659 = vpack.c.b16 %v611, %v609
  %v660 = vpack.c.b16 %v612, %v610
  %v661 = vpack.c.b16 %v615, %v613
  %v662 = vpack.c.b16 %v616, %v614
  %v663 = vpack.c.b16 %v619, %v617
  %v664 = vpack.c.b16 %v620, %v618
  %v665 = vpack.c.b16 %v623, %v621
  %v666 = vpack.c.b16 %v624, %v622
  %v667 = vpack.c.b16 %v627, %v625
  %v668 = vpack.c.b16 %v628, %v626
  %v669 = vpack.c.b16 %v631, %v629
  %v670 = vpack.c.b16 %v632, %v630
  %v671 = vpack.c.b16 %v635, %v633
  %v672 = vpack.c.b16 %v636, %v634
  %v673 = vpack.c.b16 %v639, %v637
  %v674 = vpack.c.b16 %v640, %v638
  %v675 = vpack.c.b16 %v643, %v641
  %v676 = vpack.c.b16 %v644, %v642
  %709 = vmatprep.subr.bf16.mxu0 %v646
  %710 = vmatpush1.bf16.msra.mxu0 %v645
  %711 = vmatprep.subr.bf16.mxu0 %v648
  %712 = vmatpush1.bf16.msra.mxu0 %v647
  %713 = vmatprep.subr.bf16.mxu0 %v650
  %714 = vmatpush1.bf16.msra.mxu0 %v649
  %715 = vmatprep.subr.bf16.mxu0 %v652
  %716 = vmatpush1.bf16.msra.mxu0 %v651
  %717 = vmatprep.subr.bf16.mxu0 %v654
  %718 = vmatpush1.bf16.msra.mxu0 %v653
  %719 = vmatprep.subr.bf16.mxu0 %v656
  %720 = vmatpush1.bf16.msra.mxu0 %v655
  %721 = vmatprep.subr.bf16.mxu0 %v658
  %722 = vmatpush1.bf16.msra.mxu0 %v657
  %723 = vmatprep.subr.bf16.mxu0 %v660
  %724 = vmatpush1.bf16.msra.mxu0 %v659
  %725 = vmatprep.subr.bf16.mxu0 %v662
  %726 = vmatpush1.bf16.msra.mxu0 %v661
  %727 = vmatprep.subr.bf16.mxu0 %v664
  %728 = vmatpush1.bf16.msra.mxu0 %v663
  %729 = vmatprep.subr.bf16.mxu0 %v666
  %730 = vmatpush1.bf16.msra.mxu0 %v665
  %731 = vmatprep.subr.bf16.mxu0 %v668
  %732 = vmatpush1.bf16.msra.mxu0 %v667
  %733 = vmatprep.subr.bf16.mxu0 %v670
  %734 = vmatpush1.bf16.msra.mxu0 %v669
  %735 = vmatprep.subr.bf16.mxu0 %v672
  %736 = vmatpush1.bf16.msra.mxu0 %v671
  %737 = vmatprep.subr.bf16.mxu0 %v674
  %738 = vmatpush1.bf16.msra.mxu0 %v673
  %739 = vmatprep.subr.bf16.mxu0 %v676
  %740 = vmatpush1.bf16.msra.mxu0 %v675
  %741 = vmatprep.mubr.bf16.mxu0 %v470
  %742 = vmatmul.mubr.bf16.gmra.mrb[0].mxu0 %v469
  %v743 = vpop.f32.mrb[0].mxu0
  %v744 = vadd.f32 %v517, %v743
  %v745 = vpop.f32.mrb[0].mxu0
  %v746 = vadd.f32 %v518, %v745
  %v747 = vpop.f32.mrb[0].mxu0
  %v748 = vadd.f32 %v519, %v747
  %v749 = vpop.f32.mrb[0].mxu0
  %v750 = vadd.f32 %v520, %v749
  %751 = vmatprep.mubr.bf16.mxu0 %v472
  %752 = vmatmul.mubr.bf16.gmra.mrb[0].mxu0 %v471
  %v753 = vpop.f32.mrb[0].mxu0
  %v754 = vadd.f32 %v521, %v753
  %v755 = vpop.f32.mrb[0].mxu0
  %v756 = vadd.f32 %v522, %v755
  %v757 = vpop.f32.mrb[0].mxu0
  %v758 = vadd.f32 %v523, %v757
  %v759 = vpop.f32.mrb[0].mxu0
  %v760 = vadd.f32 %v524, %v759
  %761 = vmatprep.mubr.bf16.mxu0 %v474
  %762 = vmatmul.mubr.bf16.gmra.mrb[0].mxu0 %v473
  %v763 = vpop.f32.mrb[0].mxu0
  %v764 = vadd.f32 %v525, %v763
  %v765 = vpop.f32.mrb[0].mxu0
  %v766 = vadd.f32 %v526, %v765
  %v767 = vpop.f32.mrb[0].mxu0
  %v768 = vadd.f32 %v527, %v767
  %v769 = vpop.f32.mrb[0].mxu0
  %v770 = vadd.f32 %v528, %v769
  %771 = vmatprep.mubr.bf16.mxu0 %v476
  %772 = vmatmul.mubr.bf16.gmra.mrb[0].mxu0 %v475
  %v773 = vpop.f32.mrb[0].mxu0
  %v774 = vadd.f32 %v529, %v773
  %v775 = vpop.f32.mrb[0].mxu0
  %v776 = vadd.f32 %v530, %v775
  %v777 = vpop.f32.mrb[0].mxu0
  %v778 = vadd.f32 %v531, %v777
  %v779 = vpop.f32.mrb[0].mxu0
  %v780 = vadd.f32 %v532, %v779
  %781 = vmatprep.mubr.bf16.mxu0 %v478
  %782 = vmatmul.mubr.bf16.gmra.mrb[0].mxu0 %v477
  %v783 = vpop.f32.mrb[0].mxu0
  %v784 = vadd.f32 %v533, %v783
  %v785 = vpop.f32.mrb[0].mxu0
  %v786 = vadd.f32 %v534, %v785
  %v787 = vpop.f32.mrb[0].mxu0
  %v788 = vadd.f32 %v535, %v787
  %v789 = vpop.f32.mrb[0].mxu0
  %v790 = vadd.f32 %v536, %v789
  %791 = vmatprep.mubr.bf16.mxu0 %v480
  %792 = vmatmul.mubr.bf16.gmra.mrb[0].mxu0 %v479
  %v793 = vpop.f32.mrb[0].mxu0
  %v794 = vadd.f32 %v537, %v793
  %v795 = vpop.f32.mrb[0].mxu0
  %v796 = vadd.f32 %v538, %v795
  %v797 = vpop.f32.mrb[0].mxu0
  %v798 = vadd.f32 %v539, %v797
  %v799 = vpop.f32.mrb[0].mxu0
  %v800 = vadd.f32 %v540, %v799
  %801 = vmatprep.mubr.bf16.mxu0 %v482
  %802 = vmatmul.mubr.bf16.gmra.mrb[0].mxu0 %v481
  %v803 = vpop.f32.mrb[0].mxu0
  %v804 = vadd.f32 %v541, %v803
  %v805 = vpop.f32.mrb[0].mxu0
  %v806 = vadd.f32 %v542, %v805
  %v807 = vpop.f32.mrb[0].mxu0
  %v808 = vadd.f32 %v543, %v807
  %v809 = vpop.f32.mrb[0].mxu0
  %v810 = vadd.f32 %v544, %v809
  %811 = vmatprep.mubr.bf16.mxu0 %v484
  %812 = vmatmul.mubr.bf16.gmra.mrb[0].mxu0 %v483
  %v813 = vpop.f32.mrb[0].mxu0
  %v814 = vadd.f32 %v545, %v813
  %v815 = vpop.f32.mrb[0].mxu0
  %v816 = vadd.f32 %v546, %v815
  %v817 = vpop.f32.mrb[0].mxu0
  %v818 = vadd.f32 %v547, %v817
  %v819 = vpop.f32.mrb[0].mxu0
  %v820 = vadd.f32 %v548, %v819
  %821 = vdwg.mxu0
  %v822 = vmax.f32 %v746, 0.0
  %v823 = vmax.f32 %v750, 0.0
  %v824 = vmax.f32 %v756, 0.0
  %v825 = vmax.f32 %v760, 0.0
  %v826 = vmax.f32 %v766, 0.0
  %v827 = vmax.f32 %v770, 0.0
  %v828 = vmax.f32 %v776, 0.0
  %v829 = vmax.f32 %v780, 0.0
  %v830 = vmax.f32 %v786, 0.0
  %v831 = vmax.f32 %v790, 0.0
  %v832 = vmax.f32 %v796, 0.0
  %v833 = vmax.f32 %v800, 0.0
  %v834 = vmax.f32 %v806, 0.0
  %v835 = vmax.f32 %v810, 0.0
  %v836 = vmax.f32 %v816, 0.0
  %v837 = vmax.f32 %v820, 0.0
  %v838 = vpack.c.bf16 %v823, %v822
  %v839 = vpack.c.bf16 %v825, %v824
  %v840 = vpack.c.bf16 %v827, %v826
  %v841 = vpack.c.bf16 %v829, %v828
  %v842 = vpack.c.bf16 %v831, %v830
  %v843 = vpack.c.bf16 %v833, %v832
  %v844 = vpack.c.bf16 %v835, %v834
  %v845 = vpack.c.bf16 %v837, %v836
  %v846 = vld [vmem:[%s5] sm:$0xf]
  %v847 = vld [vmem:[%s5 + $0x4] sm:$0xf]
  %v848 = vld [vmem:[%s5 + $0x8] sm:$0xf]
  %v849 = vld [vmem:[%s5 + $0xc] sm:$0xf]
  %v850 = vld [vmem:[%s5 + $0x10] sm:$0xf]
  %v851 = vld [vmem:[%s5 + $0x14] sm:$0xf]
  %v852 = vld [vmem:[%s5 + $0x18] sm:$0xf]
  %v853 = vld [vmem:[%s5 + $0x1c] sm:$0xf]
  %v854 = vld [vmem:[%s5 + $0x20] sm:$0xf]
  %v855 = vld [vmem:[%s5 + $0x24] sm:$0xf]
  %v856 = vld [vmem:[%s5 + $0x28] sm:$0xf]
  %v857 = vld [vmem:[%s5 + $0x2c] sm:$0xf]
  %v858 = vld [vmem:[%s5 + $0x30] sm:$0xf]
  %v859 = vld [vmem:[%s5 + $0x34] sm:$0xf]
  %v860 = vld [vmem:[%s5 + $0x38] sm:$0xf]
  %v861 = vld [vmem:[%s5 + $0x3c] sm:$0xf]
  %v878 = vunpack.c.l.b16 %v846
  %v879 = vunpack.c.l.b16 %v847
  %v880 = vunpack.c.l.b16 %v848
  %v881 = vunpack.c.l.b16 %v849
  %v882 = vunpack.c.l.b16 %v850
  %v883 = vunpack.c.l.b16 %v851
  %v884 = vunpack.c.l.b16 %v852
  %v885 = vunpack.c.l.b16 %v853
  %v886 = vunpack.c.l.b16 %v854
  %v887 = vunpack.c.l.b16 %v855
  %v888 = vunpack.c.l.b16 %v856
  %v889 = vunpack.c.l.b16 %v857
  %v890 = vunpack.c.l.b16 %v858
  %v891 = vunpack.c.l.b16 %v859
  %v892 = vunpack.c.l.b16 %v860
  %v893 = vunpack.c.l.b16 %v861
  %v894 = vpack.c.b16 %v879, %v878
  %v895 = vpack.c.b16 %v881, %v880
  %v896 = vpack.c.b16 %v883, %v882
  %v897 = vpack.c.b16 %v885, %v884
  %v898 = vpack.c.b16 %v887, %v886
  %v899 = vpack.c.b16 %v889, %v888
  %v900 = vpack.c.b16 %v891, %v890
  %v901 = vpack.c.b16 %v893, %v892
  %910 = vmatprep.subr.bf16.mxu0 0
  %911 = vmatpush1.bf16.msra.mxu0 %v894
  %912 = vmatprep.subr.bf16.mxu0 0
  %913 = vmatpush1.bf16.msra.mxu0 %v895
  %914 = vmatprep.subr.bf16.mxu0 0
  %915 = vmatpush1.bf16.msra.mxu0 %v896
  %916 = vmatprep.subr.bf16.mxu0 0
  %917 = vmatpush1.bf16.msra.mxu0 %v897
  %918 = vmatprep.subr.bf16.mxu0 0
  %919 = vmatpush1.bf16.msra.mxu0 %v898
  %920 = vmatprep.subr.bf16.mxu0 0
  %921 = vmatpush1.bf16.msra.mxu0 %v899
  %922 = vmatprep.subr.bf16.mxu0 0
  %923 = vmatpush1.bf16.msra.mxu0 %v900
  %924 = vmatprep.subr.bf16.mxu0 0
  %925 = vmatpush1.bf16.msra.mxu0 %v901
  %926 = vmatprep.subr.bf16.mxu0 0
  %927 = vmatpush1.bf16.msra.mxu0 0
  %928 = vmatprep.subr.bf16.mxu0 0
  %929 = vmatpush1.bf16.msra.mxu0 0
  %930 = vmatprep.subr.bf16.mxu0 0
  %931 = vmatpush1.bf16.msra.mxu0 0
  %932 = vmatprep.subr.bf16.mxu0 0
  %933 = vmatpush1.bf16.msra.mxu0 0
  %934 = vmatprep.subr.bf16.mxu0 0
  %935 = vmatpush1.bf16.msra.mxu0 0
  %936 = vmatprep.subr.bf16.mxu0 0
  %937 = vmatpush1.bf16.msra.mxu0 0
  %938 = vmatprep.subr.bf16.mxu0 0
  %939 = vmatpush1.bf16.msra.mxu0 0
  %940 = vmatprep.subr.bf16.mxu0 0
  %941 = vmatpush1.bf16.msra.mxu0 0
  %942 = vmatprep.mubr.bf16.mxu0 0
  %943 = vmatmul.mubr.bf16.gmra.mrb[0].mxu0 %v838
  %v944 = vpop.f32.mrb[0].mxu0
  %v945 = vadd.f32 0.0, %v944
  %v946 = vpop.f32.mrb[0].mxu0
  %v947 = vpop.f32.mrb[0].mxu0
  %v948 = vadd.f32 0.0, %v947
  %v949 = vpop.f32.mrb[0].mxu0
  %950 = vmatprep.mubr.bf16.mxu0 0
  %951 = vmatmul.mubr.bf16.gmra.mrb[0].mxu0 %v839
  %v952 = vpop.f32.mrb[0].mxu0
  %v953 = vadd.f32 0.0, %v952
  %v954 = vpop.f32.mrb[0].mxu0
  %v955 = vpop.f32.mrb[0].mxu0
  %v956 = vadd.f32 0.0, %v955
  %v957 = vpop.f32.mrb[0].mxu0
  %958 = vmatprep.mubr.bf16.mxu0 0
  %959 = vmatmul.mubr.bf16.gmra.mrb[0].mxu0 %v840
  %v960 = vpop.f32.mrb[0].mxu0
  %v961 = vadd.f32 0.0, %v960
  %v962 = vpop.f32.mrb[0].mxu0
  %v963 = vpop.f32.mrb[0].mxu0
  %v964 = vadd.f32 0.0, %v963
  %v965 = vpop.f32.mrb[0].mxu0
  %966 = vmatprep.mubr.bf16.mxu0 0
  %967 = vmatmul.mubr.bf16.gmra.mrb[0].mxu0 %v841
  %v968 = vpop.f32.mrb[0].mxu0
  %v969 = vadd.f32 0.0, %v968
  %v970 = vpop.f32.mrb[0].mxu0
  %v971 = vpop.f32.mrb[0].mxu0
  %v972 = vadd.f32 0.0, %v971
  %v973 = vpop.f32.mrb[0].mxu0
  %974 = vmatprep.mubr.bf16.mxu0 0
  %975 = vmatmul.mubr.bf16.gmra.mrb[0].mxu0 %v842
  %v976 = vpop.f32.mrb[0].mxu0
  %v977 = vadd.f32 0.0, %v976
  %v978 = vpop.f32.mrb[0].mxu0
  %v979 = vpop.f32.mrb[0].mxu0
  %v980 = vadd.f32 0.0, %v979
  %v981 = vpop.f32.mrb[0].mxu0
  %982 = vmatprep.mubr.bf16.mxu0 0
  %983 = vmatmul.mubr.bf16.gmra.mrb[0].mxu0 %v843
  %v984 = vpop.f32.mrb[0].mxu0
  %v985 = vadd.f32 0.0, %v984
  %v986 = vpop.f32.mrb[0].mxu0
  %v987 = vpop.f32.mrb[0].mxu0
  %v988 = vadd.f32 0.0, %v987
  %v989 = vpop.f32.mrb[0].mxu0
  %990 = vmatprep.mubr.bf16.mxu0 0
  %991 = vmatmul.mubr.bf16.gmra.mrb[0].mxu0 %v844
  %v992 = vpop.f32.mrb[0].mxu0
  %v993 = vadd.f32 0.0, %v992
  %v994 = vpop.f32.mrb[0].mxu0
  %v995 = vpop.f32.mrb[0].mxu0
  %v996 = vadd.f32 0.0, %v995
  %v997 = vpop.f32.mrb[0].mxu0
  %998 = vmatprep.mubr.bf16.mxu0 0
  %999 = vmatmul.mubr.bf16.gmra.mrb[0].mxu0 %v845
  %v1000 = vpop.f32.mrb[0].mxu0
  %v1001 = vadd.f32 0.0, %v1000
  %v1002 = vpop.f32.mrb[0].mxu0
  %v1003 = vpop.f32.mrb[0].mxu0
  %v1004 = vadd.f32 0.0, %v1003
  %v1005 = vpop.f32.mrb[0].mxu0
  %1006 = vdwg.mxu0
  %v1007 = vadd.f32 %v744, %v945
  %v1008 = vadd.f32 %v748, %v948
  %v1009 = vadd.f32 %v754, %v953
  %v1010 = vadd.f32 %v758, %v956
  %v1011 = vadd.f32 %v764, %v961
  %v1012 = vadd.f32 %v768, %v964
  %v1013 = vadd.f32 %v774, %v969
  %v1014 = vadd.f32 %v778, %v972
  %v1015 = vadd.f32 %v784, %v977
  %v1016 = vadd.f32 %v788, %v980
  %v1017 = vadd.f32 %v794, %v985
  %v1018 = vadd.f32 %v798, %v988
  %v1019 = vadd.f32 %v804, %v993
  %v1020 = vadd.f32 %v808, %v996
  %v1021 = vadd.f32 %v814, %v1001
  %v1022 = vadd.f32 %v818, %v1004
  %1023 = vst [vmem:[%s6] sm:$0xff] %v1007
  %1024 = vst [vmem:[%s6 + $0x8] sm:$0xff] %v1008
  %1025 = vst [vmem:[%s6 + $0x10] sm:$0xff] %v1009
  %1026 = vst [vmem:[%s6 + $0x18] sm:$0xff] %v1010
  %1027 = vst [vmem:[%s6 + $0x20] sm:$0xff] %v1011
  %1028 = vst [vmem:[%s6 + $0x28] sm:$0xff] %v1012
  %1029 = vst [vmem:[%s6 + $0x30] sm:$0xff] %v1013
  %1030 = vst [vmem:[%s6 + $0x38] sm:$0xff] %v1014
  %1031 = vst [vmem:[%s6 + $0x40] sm:$0xff] %v1015
  %1032 = vst [vmem:[%s6 + $0x48] sm:$0xff] %v1016
  %1033 = vst [vmem:[%s6 + $0x50] sm:$0xff] %v1017
  %1034 = vst [vmem:[%s6 + $0x58] sm:$0xff] %v1018
  %1035 = vst [vmem:[%s6 + $0x60] sm:$0xff] %v1019
  %1036 = vst [vmem:[%s6 + $0x68] sm:$0xff] %v1020
  %1037 = vst [vmem:[%s6 + $0x70] sm:$0xff] %v1021
  %1038 = vst [vmem:[%s6 + $0x78] sm:$0xff] %v1022
  // Predicated region
  $region26: #{_run_batch.1} parent=0 // pred_check
    _
  $region27: #{_run_batch.1} parent=0 // pred_check_branch
    %1040 = sbr.rel (0) target = $region29
  $region28: #{_run_batch.1} parent=0 // pred_region
    _
  $region29: #{_run_batch.1} parent=0 // pred_fallthru
    _
  // Predicated region
  $region30: #{_run_batch.1} parent=0 // pred_check
    _
  $region31: #{_run_batch.1} parent=0 // pred_check_branch
    %1042 = sbr.rel (0) target = $region33
  $region32: #{_run_batch.1} parent=0 // pred_region
    _
  $region33: #{_run_batch.1} parent=0 // pred_fallthru
    _

</llo_original>
